<compile_context>
chip_gen: v5e
topology: v5e:2x2
jax: 0.10.0
libtpu: 0.0.40
codegen_flags: <defaults>
</compile_context>

<pallas_src>
import functools

import jax
import jax.numpy as jnp
from jax.experimental import pallas as pl
from jax.experimental.pallas import tpu as pltpu


def se_conv_kernel(xse_ref, w1_ref, b1_ref, x_ref, w2_ref, o_ref, *, compute_dtype):
    # --- gate path (VPU/XLU/EUP only, no MXU), all f32 ---
    # conv2d42 (1x1, 12 -> 288, with bias) on the 1x1-spatial squeeze input:
    #   w1_ref: (12, 288) f32, xse_ref: (12, 1) f32  ->  s: (1, 288)
    s = jnp.sum(w1_ref[...] * xse_ref[...], axis=0, keepdims=True) + b1_ref[...]
    gate = jax.nn.sigmoid(s)                                   # (1, 288) f32

    # --- fold the gate into the 288->96 weights in f32, then a SINGLE cast
    #     to the MXU compute dtype (no bf16->f32->bf16 round trip) ---
    w2g = (w2_ref[...] * gate).astype(compute_dtype)           # (96, 288)

    # --- in-kernel cast of x rides under the input DMA (no wrapper astype) ---
    x = x_ref[...].astype(compute_dtype)                       # (288, 196)

    # --- conv2d43 (1x1, 288 -> 96, no bias) as a single MXU matmul in
    #     (C, H*W) layout: (96, 288) @ (288, 196) -> (96, 196), f32 accum ---
    o_ref[...] = jnp.dot(w2g, x,
                         preferred_element_type=jnp.float32).astype(o_ref.dtype)


def prepare_weights(w1, b1, w2):
    """One-time weight prep (hoisted out of the per-step path).

    w1: (288, 12, 1, 1), b1: (288,), w2: (96, 288, 1, 1).
    Returns f32 (12, 288), (1, 288), (96, 288)."""
    c_mid, c_se = w1.shape[0], w1.shape[1]
    c_out = w2.shape[0]
    w1_t = jnp.asarray(w1, jnp.float32).reshape(c_mid, c_se).T    # (12, 288)
    b1_r = jnp.asarray(b1, jnp.float32).reshape(1, c_mid)         # (1, 288)
    w2_m = jnp.asarray(w2, jnp.float32).reshape(c_out, c_mid)     # (96, 288) f32
    return w1_t, b1_r, w2_m


def se_conv(x128, x125, prepped, *, compute_dtype=jnp.bfloat16,
            out_dtype=jnp.float32):
    """x128: (1, 12, 1, 1) squeeze input; x125: (1, 288, H, W) feature map.
    prepped: output of prepare_weights(). Returns (1, 96, H, W) in out_dtype.

    compute_dtype: dtype of the main matmul inputs (bf16 recommended on TPU;
    float32 reproduces the reference to ~1e-6). Casts happen inside the kernel.
    out_dtype: dtype of the emitted output (use the consumer's dtype)."""
    w1_t, b1_r, w2_m = prepped
    N, c_se, _, _ = x128.shape
    _, c_mid, H, W = x125.shape
    c_out = w2_m.shape[0]
    assert N == 1, "kernel written for N=1 (as in the reference module)"

    # Free (contiguous) reshapes only -- no transposes, no dtype casts here.
    x_chw = x125.reshape(c_mid, H * W)                            # (288, 196) f32
    xse = x128.reshape(c_se, 1)                                   # (12, 1)    f32
    # TODO(synk): xse could be passed via SMEM / pre-broadcast to trim the
    # (8,128)-padded VMEM tile in the gate prologue; second-order, skipped.

    cd_size = jnp.dtype(compute_dtype).itemsize
    out_size = jnp.dtype(out_dtype).itemsize
    cost = pl.CostEstimate(
        flops=2 * c_out * c_mid * H * W + 2 * c_mid * c_se + c_out * c_mid,
        transcendentals=c_mid,                                    # 288 sigmoids
        bytes_accessed=(c_mid * H * W * 4                         # x (f32 in)
                        + c_out * c_mid * 4                       # w2 (f32 in)
                        + c_se * c_mid * 4 + c_mid * 4 + c_se * 4  # w1, b1, xse
                        + c_out * H * W * out_size),              # out
    )
    del cd_size  # (compute dtype only affects in-kernel vreg traffic)

    # Everything (inputs + weights + output) is well under 1 MiB, so a single
    # whole-array VMEM block (no grid) is the right tiling on every generation.
    out_chw = pl.pallas_call(
        functools.partial(se_conv_kernel, compute_dtype=compute_dtype),
        out_shape=jax.ShapeDtypeStruct((c_out, H * W), out_dtype),
        in_specs=[
            pl.BlockSpec(memory_space=pltpu.MemorySpace.VMEM),  # xse (12, 1)
            pl.BlockSpec(memory_space=pltpu.MemorySpace.VMEM),  # w1  (12, 288)
            pl.BlockSpec(memory_space=pltpu.MemorySpace.VMEM),  # b1  (1, 288)
            pl.BlockSpec(memory_space=pltpu.MemorySpace.VMEM),  # x   (288, 196)
            pl.BlockSpec(memory_space=pltpu.MemorySpace.VMEM),  # w2  (96, 288)
        ],
        out_specs=pl.BlockSpec(memory_space=pltpu.MemorySpace.VMEM),
        cost_estimate=cost,
    )(xse, w1_t, b1_r, x_chw, w2_m)

    # Free reshape back to NCHW.
    return out_chw.reshape(N, c_out, H, W)


def reference(x128, x125, w1, b1, w2):
    """Pure-JAX reference matching the PyTorch module semantics (all f32)."""
    g = jnp.einsum("oi,nihw->nohw", w1.reshape(288, 12), x128) + b1.reshape(1, -1, 1, 1)
    g = jax.nn.sigmoid(g)                                    # (1, 288, 1, 1)
    y = g * x125                                             # (1, 288, 14, 14)
    return jnp.einsum("oi,nihw->nohw", w2.reshape(96, 288), y)


if __name__ == "__main__":
    key = jax.random.PRNGKey(0)
    k1, k2, k3, k4, k5 = jax.random.split(key, 5)

    # Inputs (same shapes as the reference module)
    x125 = jax.random.normal(k1, (1, 288, 14, 14), dtype=jnp.float32)
    x128 = jax.random.normal(k2, (1, 12, 1, 1), dtype=jnp.float32)

    # Deterministic parameter init (shapes from the module's __init__)
    w1 = jax.random.normal(k3, (288, 12, 1, 1), dtype=jnp.float32) * 0.1  # conv2d42 w
    b1 = jax.random.normal(k4, (288,), dtype=jnp.float32) * 0.1           # conv2d42 b
    w2 = jax.random.normal(k5, (96, 288, 1, 1), dtype=jnp.float32) * 0.1  # conv2d43 w

    ref = reference(x128, x125, w1, b1, w2)

    # One-time weight prep (hoisted out of the hot path).
    prepped = prepare_weights(w1, b1, w2)

    # Exact-precision path: f32 matmul + f32 output, tight tolerance.
    se_f32 = jax.jit(functools.partial(
        se_conv, compute_dtype=jnp.float32, out_dtype=jnp.float32))
    out_f32 = jax.block_until_ready(se_f32(x128, x125, prepped))
    assert out_f32.shape == (1, 96, 14, 14), out_f32.shape
    assert jnp.allclose(out_f32, ref, atol=1e-4, rtol=1e-4), \
        float(jnp.max(jnp.abs(out_f32 - ref)))

    # Performance path: bf16 matmul inputs (cast in-kernel, f32 accumulation,
    # f32 gate path) and bf16 output (consumer dtype).
    se_bf16 = jax.jit(functools.partial(
        se_conv, compute_dtype=jnp.bfloat16, out_dtype=jnp.bfloat16))
    out_bf16 = jax.block_until_ready(se_bf16(x128, x125, prepped))
    assert out_bf16.shape == (1, 96, 14, 14), out_bf16.shape
    assert out_bf16.dtype == jnp.bfloat16, out_bf16.dtype
    assert jnp.allclose(out_bf16.astype(jnp.float32), ref, atol=2e-2, rtol=2e-2), \
        float(jnp.max(jnp.abs(out_bf16.astype(jnp.float32) - ref)))

    print("KERNEL_OK")
</pallas_src>

<mosaic_0001>
module attributes {stable_mosaic.version = 11 : i64} {
  func.func @se_conv_kernel(%arg0: memref<12x1xf32, #tpu.memory_space<vmem>>, %arg1: memref<12x288xf32, #tpu.memory_space<vmem>>, %arg2: memref<1x288xf32, #tpu.memory_space<vmem>>, %arg3: memref<288x196xf32, #tpu.memory_space<vmem>>, %arg4: memref<96x288xf32, #tpu.memory_space<vmem>>, %arg5: memref<96x196xf32, #tpu.memory_space<vmem>>) attributes {dimension_semantics = [], scalar_prefetch = 0 : i64, scratch_operands = 0 : i64, tpu.core_type = #tpu.core_type<tc>} {
    %c0 = arith.constant 0 : index
    %c0_0 = arith.constant 0 : index
    %0 = vector.load %arg1[%c0, %c0_0] : memref<12x288xf32, #tpu.memory_space<vmem>>, vector<12x288xf32>
    %c0_1 = arith.constant 0 : index
    %c0_2 = arith.constant 0 : index
    %1 = vector.load %arg0[%c0_1, %c0_2] : memref<12x1xf32, #tpu.memory_space<vmem>>, vector<12x1xf32>
    %2 = vector.broadcast %1 : vector<12x1xf32> to vector<12x288xf32>
    %3 = arith.mulf %0, %2 : vector<12x288xf32>
    %cst = arith.constant dense<0.000000e+00> : vector<288xf32>
    %4 = vector.multi_reduction <add>, %3, %cst [0] : vector<12x288xf32> to vector<288xf32>
    %5 = vector.shape_cast %4 : vector<288xf32> to vector<1x288xf32>
    %c0_3 = arith.constant 0 : index
    %c0_4 = arith.constant 0 : index
    %6 = vector.load %arg2[%c0_3, %c0_4] : memref<1x288xf32, #tpu.memory_space<vmem>>, vector<1x288xf32>
    %7 = arith.addf %5, %6 : vector<1x288xf32>
    %8 = arith.negf %7 : vector<1x288xf32>
    %9 = math.exp %8 : vector<1x288xf32>
    %cst_5 = arith.constant 1.000000e+00 : f32
    %10 = vector.broadcast %cst_5 : f32 to vector<1x288xf32>
    %11 = arith.addf %10, %9 : vector<1x288xf32>
    %12 = arith.divf %10, %11 : vector<1x288xf32>
    %c0_6 = arith.constant 0 : index
    %c0_7 = arith.constant 0 : index
    %13 = vector.load %arg4[%c0_6, %c0_7] : memref<96x288xf32, #tpu.memory_space<vmem>>, vector<96x288xf32>
    %14 = vector.broadcast %12 : vector<1x288xf32> to vector<96x288xf32>
    %15 = arith.mulf %13, %14 : vector<96x288xf32>
    %c0_8 = arith.constant 0 : index
    %c0_9 = arith.constant 0 : index
    %16 = vector.load %arg3[%c0_8, %c0_9] : memref<288x196xf32, #tpu.memory_space<vmem>>, vector<288x196xf32>
    %cst_10 = arith.constant dense<0.000000e+00> : vector<96x196xf32>
    %17 = tpu.matmul %15, %16, %cst_10 {dimension_numbers = #tpu.dot_dimension_numbers<[1], [0], [0], [1], [0, 0, 1, 1], [], []>} : vector<96x288xf32>, vector<288x196xf32>, vector<96x196xf32> -> vector<96x196xf32>
    %c0_11 = arith.constant 0 : index
    %c0_12 = arith.constant 0 : index
    %18 = vector.load %arg5[%c0_11, %c0_12] : memref<96x196xf32, #tpu.memory_space<vmem>>, vector<96x196xf32>
    tpu.vector_store %arg5[%c0_11, %c0_12], %17 {strides = array<i32>} : memref<96x196xf32, #tpu.memory_space<vmem>>, vector<96x196xf32>,
    return
  }
}

</mosaic_0001>

<llo_original>
// kernel: se_conv.1
$region0: #{se_conv.1}
  #allocation0 [shape = 'u32[]', space=smem, size = 0x4, offset = 0x4, fixed_abs, tag = 'smem constant byte address 0x4 - core index']
  #allocation1 [shape = 'u32[72,128]{1,0:T(1,128)}', space=vmem, size = 0x9000, scoped, tag = 'internal scratch']
  %s0 = inlined_call_operand.vmem [shape: f32[12,1], index: 0, kind: input, shape index: {}]
  %s1 = inlined_call_operand.vmem [shape: f32[12,288], index: 1, kind: input, shape index: {}]
  %s2 = inlined_call_operand.vmem [shape: f32[1,288], index: 2, kind: input, shape index: {}]
  %s3 = inlined_call_operand.vmem [shape: f32[288,196], index: 3, kind: input, shape index: {}]
  %s4 = inlined_call_operand.vmem [shape: f32[96,288], index: 4, kind: input, shape index: {}]
  %s5 = inlined_call_operand.vmem [shape: f32[96,196], index: 5, kind: output, shape index: {}]
  %s6 = sld [smem:[#allocation0]]
  $region30: #{se_conv.1} parent=0
    _
  %s8 = ssub.s32 1, %s6
  %s9 = scalar_select 0, %s8, %s6
  // Predicated region
  $region2: #{se_conv.1} parent=0 // pred_check
    _
  $region3: #{se_conv.1} parent=0 // pred_check_branch
    %11 = sbr.rel (0) target = $region5
  $region4: #{se_conv.1} parent=0 // pred_region
    _
  $region5: #{se_conv.1} parent=0 // pred_fallthru
    _
  // Predicated region
  $region6: #{se_conv.1} parent=0 // pred_check
    _
  $region7: #{se_conv.1} parent=0 // pred_check_branch
    %13 = sbr.rel (0) target = $region9
  $region8: #{se_conv.1} parent=0 // pred_region
    _
  $region9: #{se_conv.1} parent=0 // pred_fallthru
    _
  // Predicated region
  $region10: #{se_conv.1} parent=0 // pred_check
    _
  $region11: #{se_conv.1} parent=0 // pred_check_branch
    %15 = sbr.rel (0) target = $region13
  $region12: #{se_conv.1} parent=0 // pred_region
    _
  $region13: #{se_conv.1} parent=0 // pred_fallthru
    _
  // Predicated region
  $region14: #{se_conv.1} parent=0 // pred_check
    _
  $region15: #{se_conv.1} parent=0 // pred_check_branch
    %17 = sbr.rel (0) target = $region17
  $region16: #{se_conv.1} parent=0 // pred_region
    _
  $region17: #{se_conv.1} parent=0 // pred_fallthru
    _
  // Predicated region
  $region18: #{se_conv.1} parent=0 // pred_check
    _
  $region19: #{se_conv.1} parent=0 // pred_check_branch
    %19 = sbr.rel (0) target = $region21
  $region20: #{se_conv.1} parent=0 // pred_region
    _
  $region21: #{se_conv.1} parent=0 // pred_fallthru
    _
  %v20 = vld [vmem:[%s1] sm:$0xff]
  %v21 = vld [vmem:[%s1 + $0x8] sm:$0xff]
  %v22 = vld [vmem:[%s1 + $0x10] sm:$0xff]
  %v23 = vld [vmem:[%s1 + $0x18] sm:$0xf]
  %v24 = vld [vmem:[%s1 + $0x20] sm:$0xf]
  %v25 = vld [vmem:[%s1 + $0x28] sm:$0xf]
  %v26 = vld [vmem:[%s0] sm:$0xff]
  %v27 = vld [vmem:[%s0 + $0x8] sm:$0xf]
  %29 = vset.pattern.permute.xlu0 0
  %30 = vperm.xlu0 %29, %v26
  %v31 = vpop.permute.xlu0 %30
  %34 = vset.pattern.permute.xlu0 0
  %35 = vperm.xlu0 %34, %v27
  %v36 = vpop.permute.xlu0 %35
  %v38 = vmul.f32 %v20, %v31
  %v39 = vmul.f32 %v21, %v31
  %v40 = vmul.f32 %v22, %v31
  %v41 = vmul.f32 %v23, %v36
  %v42 = vmul.f32 %v24, %v36
  %v43 = vmul.f32 %v25, %v36
  %vm44 = vcmask 1043456
  %v45 = vsel %vm44, %v41, 0.0
  %v46 = vadd.f32 %v38, %v45
  %v47 = vrot.slane %v46, 4
  %v48 = vadd.f32 %v46, %v47
  %v49 = vrot.slane %v48, 2
  %v50 = vadd.f32 %v48, %v49
  %v51 = vrot.slane %v50, 1
  %v52 = vadd.f32 %v50, %v51
  %v53 = vsel %vm44, %v42, 0.0
  %v54 = vadd.f32 %v39, %v53
  %v55 = vrot.slane %v54, 4
  %v56 = vadd.f32 %v54, %v55
  %v57 = vrot.slane %v56, 2
  %v58 = vadd.f32 %v56, %v57
  %v59 = vrot.slane %v58, 1
  %v60 = vadd.f32 %v58, %v59
  %vm61 = vcmask 261120
  %v62 = vsel %vm61, %v40, 0.0
  %vm63 = vcmask 257024
  %v64 = vsel %vm63, %v43, 0.0
  %v65 = vadd.f32 %v62, %v64
  %v66 = vrot.slane %v65, 4
  %v67 = vadd.f32 %v65, %v66
  %v68 = vrot.slane %v67, 2
  %v69 = vadd.f32 %v67, %v68
  %v70 = vrot.slane %v69, 1
  %v71 = vadd.f32 %v69, %v70
  %v72 = vld [vmem:[%s2] sm:$0x7]
  %v74 = vperm.slane %v72, 0
  %v75 = vperm.slane %v72, 1
  %v76 = vperm.slane %v72, 2
  %v80 = vadd.f32 %v52, %v74
  %v81 = vadd.f32 %v60, %v75
  %v82 = vadd.f32 %v71, %v76
  %v83 = vxor.u32 %v80, 2147483648
  %v84 = vxor.u32 %v81, 2147483648
  %v85 = vxor.u32 %v82, 2147483648
  %v86 = vmul.f32 %v83, 1.442695
  %v87 = vpow.pop %v86
  %v88 = vmul.f32 %v84, 1.442695
  %v89 = vpow.pop %v88
  %v90 = vmul.f32 %v85, 1.442695
  %v91 = vpow.pop %v90
  %v92 = vadd.f32 %v87, 1.0
  %v93 = vadd.f32 %v89, 1.0
  %v94 = vadd.f32 %v91, 1.0
  %v95 = vrcp.pop %v92
  %v96 = vmul.f32 %v92, %v95
  %v97 = vsub.f32 1.0, %v96
  %v98 = vmul.f32 %v95, %v97
  %v99 = vadd.f32 %v95, %v98
  %vm100 = vweird.f32 %v92
  %vm101 = vweird.f32 %v95
  %vm102 = vmor %vm100, %vm101
  %v103 = vsel %vm102, %v95, %v99
  %v104 = vand.u32 2147483647, %v92
  %vm105 = vcmp.eq.f32.partialorder %v104, 8.507059e+37
  %v106 = vand.u32 %v92, 2147483648
  %v107 = vor.u32 1.1754944e-38, %v106
  %v108 = vsel %vm105, %v107, %v103
  %v109 = vmul.f32 1.0, %v108
  %v110 = vrcp.pop %v93
  %v111 = vmul.f32 %v93, %v110
  %v112 = vsub.f32 1.0, %v111
  %v113 = vmul.f32 %v110, %v112
  %v114 = vadd.f32 %v110, %v113
  %vm115 = vweird.f32 %v93
  %vm116 = vweird.f32 %v110
  %vm117 = vmor %vm115, %vm116
  %v118 = vsel %vm117, %v110, %v114
  %v119 = vand.u32 2147483647, %v93
  %vm120 = vcmp.eq.f32.partialorder %v119, 8.507059e+37
  %v121 = vand.u32 %v93, 2147483648
  %v122 = vor.u32 1.1754944e-38, %v121
  %v123 = vsel %vm120, %v122, %v118
  %v124 = vmul.f32 1.0, %v123
  %v125 = vrcp.pop %v94
  %v126 = vmul.f32 %v94, %v125
  %v127 = vsub.f32 1.0, %v126
  %v128 = vmul.f32 %v125, %v127
  %v129 = vadd.f32 %v125, %v128
  %vm130 = vweird.f32 %v94
  %vm131 = vweird.f32 %v125
  %vm132 = vmor %vm130, %vm131
  %v133 = vsel %vm132, %v125, %v129
  %v134 = vand.u32 2147483647, %v94
  %vm135 = vcmp.eq.f32.partialorder %v134, 8.507059e+37
  %v136 = vand.u32 %v94, 2147483648
  %v137 = vor.u32 1.1754944e-38, %v136
  %v138 = vsel %vm135, %v137, %v133
  %v139 = vmul.f32 1.0, %v138
  %v140 = vld [vmem:[%s4] sm:$0xff]
  %v141 = vld [vmem:[%s4 + $0x8] sm:$0xff]
  %v142 = vld [vmem:[%s4 + $0x10] sm:$0xff]
  %v143 = vld [vmem:[%s4 + $0x18] sm:$0xff]
  %v144 = vld [vmem:[%s4 + $0x20] sm:$0xff]
  %v145 = vld [vmem:[%s4 + $0x28] sm:$0xff]
  %v146 = vld [vmem:[%s4 + $0x30] sm:$0xff]
  %v147 = vld [vmem:[%s4 + $0x38] sm:$0xff]
  %v148 = vld [vmem:[%s4 + $0x40] sm:$0xff]
  %v149 = vld [vmem:[%s4 + $0x48] sm:$0xff]
  %v150 = vld [vmem:[%s4 + $0x50] sm:$0xff]
  %v151 = vld [vmem:[%s4 + $0x58] sm:$0xff]
  %v152 = vld [vmem:[%s4 + $0x60] sm:$0xff]
  %v153 = vld [vmem:[%s4 + $0x68] sm:$0xff]
  %v154 = vld [vmem:[%s4 + $0x70] sm:$0xff]
  %v155 = vld [vmem:[%s4 + $0x78] sm:$0xff]
  %v156 = vld [vmem:[%s4 + $0x80] sm:$0xff]
  %v157 = vld [vmem:[%s4 + $0x88] sm:$0xff]
  %v158 = vld [vmem:[%s4 + $0x90] sm:$0xff]
  %v159 = vld [vmem:[%s4 + $0x98] sm:$0xff]
  %v160 = vld [vmem:[%s4 + $0xa0] sm:$0xff]
  %v161 = vld [vmem:[%s4 + $0xa8] sm:$0xff]
  %v162 = vld [vmem:[%s4 + $0xb0] sm:$0xff]
  %v163 = vld [vmem:[%s4 + $0xb8] sm:$0xff]
  %v164 = vld [vmem:[%s4 + $0xc0] sm:$0xff]
  %v165 = vld [vmem:[%s4 + $0xc8] sm:$0xff]
  %v166 = vld [vmem:[%s4 + $0xd0] sm:$0xff]
  %v167 = vld [vmem:[%s4 + $0xd8] sm:$0xff]
  %v168 = vld [vmem:[%s4 + $0xe0] sm:$0xff]
  %v169 = vld [vmem:[%s4 + $0xe8] sm:$0xff]
  %v170 = vld [vmem:[%s4 + $0xf0] sm:$0xff]
  %v171 = vld [vmem:[%s4 + $0xf8] sm:$0xff]
  %v172 = vld [vmem:[%s4 + $0x100] sm:$0xff]
  %v173 = vld [vmem:[%s4 + $0x108] sm:$0xff]
  %v174 = vld [vmem:[%s4 + $0x110] sm:$0xff]
  %v175 = vld [vmem:[%s4 + $0x118] sm:$0xff]
  %v176 = vperm.slane %v109, 0
  %v177 = vperm.slane %v124, 0
  %v178 = vperm.slane %v139, 0
  %v179 = vmul.f32 %v140, %v176
  %v180 = vmul.f32 %v141, %v177
  %v181 = vmul.f32 %v142, %v178
  %v182 = vmul.f32 %v143, %v176
  %v183 = vmul.f32 %v144, %v177
  %v184 = vmul.f32 %v145, %v178
  %v185 = vmul.f32 %v146, %v176
  %v186 = vmul.f32 %v147, %v177
  %v187 = vmul.f32 %v148, %v178
  %v188 = vmul.f32 %v149, %v176
  %v189 = vmul.f32 %v150, %v177
  %v190 = vmul.f32 %v151, %v178
  %v191 = vmul.f32 %v152, %v176
  %v192 = vmul.f32 %v153, %v177
  %v193 = vmul.f32 %v154, %v178
  %v194 = vmul.f32 %v155, %v176
  %v195 = vmul.f32 %v156, %v177
  %v196 = vmul.f32 %v157, %v178
  %v197 = vmul.f32 %v158, %v176
  %v198 = vmul.f32 %v159, %v177
  %v199 = vmul.f32 %v160, %v178
  %v200 = vmul.f32 %v161, %v176
  %v201 = vmul.f32 %v162, %v177
  %v202 = vmul.f32 %v163, %v178
  %v203 = vmul.f32 %v164, %v176
  %v204 = vmul.f32 %v165, %v177
  %v205 = vmul.f32 %v166, %v178
  %v206 = vmul.f32 %v167, %v176
  %v207 = vmul.f32 %v168, %v177
  %v208 = vmul.f32 %v169, %v178
  %v209 = vmul.f32 %v170, %v176
  %v210 = vmul.f32 %v171, %v177
  %v211 = vmul.f32 %v172, %v178
  %v212 = vmul.f32 %v173, %v176
  %v213 = vmul.f32 %v174, %v177
  %v214 = vmul.f32 %v175, %v178
  %v215 = vld [vmem:[%s3] sm:$0xff]
  %v216 = vld [vmem:[%s3 + $0x8] sm:$0xff]
  %v217 = vld [vmem:[%s3 + $0x10] sm:$0xff]
  %v218 = vld [vmem:[%s3 + $0x18] sm:$0xff]
  %v219 = vld [vmem:[%s3 + $0x20] sm:$0xff]
  %v220 = vld [vmem:[%s3 + $0x28] sm:$0xff]
  %v221 = vld [vmem:[%s3 + $0x30] sm:$0xff]
  %v222 = vld [vmem:[%s3 + $0x38] sm:$0xff]
  %v223 = vld [vmem:[%s3 + $0x40] sm:$0xff]
  %v224 = vld [vmem:[%s3 + $0x48] sm:$0xff]
  %v225 = vld [vmem:[%s3 + $0x50] sm:$0xff]
  %v226 = vld [vmem:[%s3 + $0x58] sm:$0xff]
  %v227 = vld [vmem:[%s3 + $0x60] sm:$0xff]
  %v228 = vld [vmem:[%s3 + $0x68] sm:$0xff]
  %v229 = vld [vmem:[%s3 + $0x70] sm:$0xff]
  %v230 = vld [vmem:[%s3 + $0x78] sm:$0xff]
  %v231 = vld [vmem:[%s3 + $0x80] sm:$0xff]
  %v232 = vld [vmem:[%s3 + $0x88] sm:$0xff]
  %v233 = vld [vmem:[%s3 + $0x90] sm:$0xff]
  %v234 = vld [vmem:[%s3 + $0x98] sm:$0xff]
  %v235 = vld [vmem:[%s3 + $0xa0] sm:$0xff]
  %v236 = vld [vmem:[%s3 + $0xa8] sm:$0xff]
  %v237 = vld [vmem:[%s3 + $0xb0] sm:$0xff]
  %v238 = vld [vmem:[%s3 + $0xb8] sm:$0xff]
  %v239 = vld [vmem:[%s3 + $0xc0] sm:$0xff]
  %v240 = vld [vmem:[%s3 + $0xc8] sm:$0xff]
  %v241 = vld [vmem:[%s3 + $0xd0] sm:$0xff]
  %v242 = vld [vmem:[%s3 + $0xd8] sm:$0xff]
  %v243 = vld [vmem:[%s3 + $0xe0] sm:$0xff]
  %v244 = vld [vmem:[%s3 + $0xe8] sm:$0xff]
  %v245 = vld [vmem:[%s3 + $0xf0] sm:$0xff]
  %v246 = vld [vmem:[%s3 + $0xf8] sm:$0xff]
  %v247 = vld [vmem:[%s3 + $0x100] sm:$0xff]
  %v248 = vld [vmem:[%s3 + $0x108] sm:$0xff]
  %v249 = vld [vmem:[%s3 + $0x110] sm:$0xff]
  %v250 = vld [vmem:[%s3 + $0x118] sm:$0xff]
  %v251 = vld [vmem:[%s3 + $0x120] sm:$0xff]
  %v252 = vld [vmem:[%s3 + $0x128] sm:$0xff]
  %v253 = vld [vmem:[%s3 + $0x130] sm:$0xff]
  %v254 = vld [vmem:[%s3 + $0x138] sm:$0xff]
  %v255 = vld [vmem:[%s3 + $0x140] sm:$0xff]
  %v256 = vld [vmem:[%s3 + $0x148] sm:$0xff]
  %v257 = vld [vmem:[%s3 + $0x150] sm:$0xff]
  %v258 = vld [vmem:[%s3 + $0x158] sm:$0xff]
  %v259 = vld [vmem:[%s3 + $0x160] sm:$0xff]
  %v260 = vld [vmem:[%s3 + $0x168] sm:$0xff]
  %v261 = vld [vmem:[%s3 + $0x170] sm:$0xff]
  %v262 = vld [vmem:[%s3 + $0x178] sm:$0xff]
  %v263 = vld [vmem:[%s3 + $0x180] sm:$0xff]
  %v264 = vld [vmem:[%s3 + $0x188] sm:$0xff]
  %v265 = vld [vmem:[%s3 + $0x190] sm:$0xff]
  %v266 = vld [vmem:[%s3 + $0x198] sm:$0xff]
  %v267 = vld [vmem:[%s3 + $0x1a0] sm:$0xff]
  %v268 = vld [vmem:[%s3 + $0x1a8] sm:$0xff]
  %v269 = vld [vmem:[%s3 + $0x1b0] sm:$0xff]
  %v270 = vld [vmem:[%s3 + $0x1b8] sm:$0xff]
  %v271 = vld [vmem:[%s3 + $0x1c0] sm:$0xff]
  %v272 = vld [vmem:[%s3 + $0x1c8] sm:$0xff]
  %v273 = vld [vmem:[%s3 + $0x1d0] sm:$0xff]
  %v274 = vld [vmem:[%s3 + $0x1d8] sm:$0xff]
  %v275 = vld [vmem:[%s3 + $0x1e0] sm:$0xff]
  %v276 = vld [vmem:[%s3 + $0x1e8] sm:$0xff]
  %v277 = vld [vmem:[%s3 + $0x1f0] sm:$0xff]
  %v278 = vld [vmem:[%s3 + $0x1f8] sm:$0xff]
  %v279 = vld [vmem:[%s3 + $0x200] sm:$0xff]
  %v280 = vld [vmem:[%s3 + $0x208] sm:$0xff]
  %v281 = vld [vmem:[%s3 + $0x210] sm:$0xff]
  %v282 = vld [vmem:[%s3 + $0x218] sm:$0xff]
  %v283 = vld [vmem:[%s3 + $0x220] sm:$0xff]
  %v284 = vld [vmem:[%s3 + $0x228] sm:$0xff]
  %v285 = vld [vmem:[%s3 + $0x230] sm:$0xff]
  %v286 = vld [vmem:[%s3 + $0x238] sm:$0xff]
  %v288 = vsel %vm61, %v181, 0
  %v291 = vsel %vm61, %v184, 0
  %v294 = vsel %vm61, %v187, 0
  %v297 = vsel %vm61, %v190, 0
  %v300 = vsel %vm61, %v193, 0
  %v303 = vsel %vm61, %v196, 0
  %v306 = vsel %vm61, %v199, 0
  %v309 = vsel %vm61, %v202, 0
  %v312 = vsel %vm61, %v205, 0
  %v315 = vsel %vm61, %v208, 0
  %v318 = vsel %vm61, %v211, 0
  %v321 = vsel %vm61, %v214, 0
  %323 = vmatpush.msra.mxu0 %v245
  %324 = vmatpush.msra.mxu0 %v243
  %325 = vmatpush.msra.mxu0 %v241
  %326 = vmatpush.msra.mxu0 %v239
  %327 = vmatpush.msra.mxu0 %v237
  %328 = vmatpush.msra.mxu0 %v235
  %329 = vmatpush.msra.mxu0 %v233
  %330 = vmatpush.msra.mxu0 %v231
  %331 = vmatpush.msra.mxu0 %v229
  %332 = vmatpush.msra.mxu0 %v227
  %333 = vmatpush.msra.mxu0 %v225
  %334 = vmatpush.msra.mxu0 %v223
  %335 = vmatpush.msra.mxu0 %v221
  %336 = vmatpush.msra.mxu0 %v219
  %337 = vmatpush.msra.mxu0 %v217
  %338 = vmatpush.msra.mxu0 %v215
  %339 = vmatmul.f32.gmra.mxu0 %v179
  %v340 = vpop.f32.mrf.mxu0
  %v341 = vadd.f32 0.0, %v340
  %342 = vmatmul.f32.gmra.mxu0 %v182
  %v343 = vpop.f32.mrf.mxu0
  %v344 = vadd.f32 0.0, %v343
  %345 = vmatmul.f32.gmra.mxu0 %v185
  %v346 = vpop.f32.mrf.mxu0
  %v347 = vadd.f32 0.0, %v346
  %348 = vmatmul.f32.gmra.mxu0 %v188
  %v349 = vpop.f32.mrf.mxu0
  %v350 = vadd.f32 0.0, %v349
  %351 = vmatmul.f32.gmra.mxu0 %v191
  %v352 = vpop.f32.mrf.mxu0
  %v353 = vadd.f32 0.0, %v352
  %354 = vmatmul.f32.gmra.mxu0 %v194
  %v355 = vpop.f32.mrf.mxu0
  %v356 = vadd.f32 0.0, %v355
  %357 = vmatmul.f32.gmra.mxu0 %v197
  %v358 = vpop.f32.mrf.mxu0
  %v359 = vadd.f32 0.0, %v358
  %360 = vmatmul.f32.gmra.mxu0 %v200
  %v361 = vpop.f32.mrf.mxu0
  %v362 = vadd.f32 0.0, %v361
  %363 = vmatmul.f32.gmra.mxu0 %v203
  %v364 = vpop.f32.mrf.mxu0
  %v365 = vadd.f32 0.0, %v364
  %366 = vmatmul.f32.gmra.mxu0 %v206
  %v367 = vpop.f32.mrf.mxu0
  %v368 = vadd.f32 0.0, %v367
  %369 = vmatmul.f32.gmra.mxu0 %v209
  %v370 = vpop.f32.mrf.mxu0
  %v371 = vadd.f32 0.0, %v370
  %372 = vmatmul.f32.gmra.mxu0 %v212
  %v373 = vpop.f32.mrf.mxu0
  %v374 = vadd.f32 0.0, %v373
  %375 = vdwg.mxu0
  %376 = vmatpush.msra.mxu0 %v277
  %377 = vmatpush.msra.mxu0 %v275
  %378 = vmatpush.msra.mxu0 %v273
  %379 = vmatpush.msra.mxu0 %v271
  %380 = vmatpush.msra.mxu0 %v269
  %381 = vmatpush.msra.mxu0 %v267
  %382 = vmatpush.msra.mxu0 %v265
  %383 = vmatpush.msra.mxu0 %v263
  %384 = vmatpush.msra.mxu0 %v261
  %385 = vmatpush.msra.mxu0 %v259
  %386 = vmatpush.msra.mxu0 %v257
  %387 = vmatpush.msra.mxu0 %v255
  %388 = vmatpush.msra.mxu0 %v253
  %389 = vmatpush.msra.mxu0 %v251
  %390 = vmatpush.msra.mxu0 %v249
  %391 = vmatpush.msra.mxu0 %v247
  %392 = vmatmul.f32.gmra.mxu0 %v180
  %v393 = vpop.f32.mrf.mxu0
  %v394 = vadd.f32 %v341, %v393
  %395 = vmatmul.f32.gmra.mxu0 %v183
  %v396 = vpop.f32.mrf.mxu0
  %v397 = vadd.f32 %v344, %v396
  %398 = vmatmul.f32.gmra.mxu0 %v186
  %v399 = vpop.f32.mrf.mxu0
  %v400 = vadd.f32 %v347, %v399
  %401 = vmatmul.f32.gmra.mxu0 %v189
  %v402 = vpop.f32.mrf.mxu0
  %v403 = vadd.f32 %v350, %v402
  %404 = vmatmul.f32.gmra.mxu0 %v192
  %v405 = vpop.f32.mrf.mxu0
  %v406 = vadd.f32 %v353, %v405
  %407 = vmatmul.f32.gmra.mxu0 %v195
  %v408 = vpop.f32.mrf.mxu0
  %v409 = vadd.f32 %v356, %v408
  %410 = vmatmul.f32.gmra.mxu0 %v198
  %v411 = vpop.f32.mrf.mxu0
  %v412 = vadd.f32 %v359, %v411
  %413 = vmatmul.f32.gmra.mxu0 %v201
  %v414 = vpop.f32.mrf.mxu0
  %v415 = vadd.f32 %v362, %v414
  %416 = vmatmul.f32.gmra.mxu0 %v204
  %v417 = vpop.f32.mrf.mxu0
  %v418 = vadd.f32 %v365, %v417
  %419 = vmatmul.f32.gmra.mxu0 %v207
  %v420 = vpop.f32.mrf.mxu0
  %v421 = vadd.f32 %v368, %v420
  %422 = vmatmul.f32.gmra.mxu0 %v210
  %v423 = vpop.f32.mrf.mxu0
  %v424 = vadd.f32 %v371, %v423
  %425 = vmatmul.f32.gmra.mxu0 %v213
  %v426 = vpop.f32.mrf.mxu0
  %v427 = vadd.f32 %v374, %v426
  %428 = vdwg.mxu0
  %429 = vmatpush.msra.mxu0 0.0
  %430 = vmatpush.msra.mxu0 0.0
  %431 = vmatpush.msra.mxu0 0.0
  %432 = vmatpush.msra.mxu0 0.0
  %433 = vmatpush.msra.mxu0 0.0
  %434 = vmatpush.msra.mxu0 0.0
  %435 = vmatpush.msra.mxu0 0.0
  %436 = vmatpush.msra.mxu0 0.0
  %437 = vmatpush.msra.mxu0 0.0
  %438 = vmatpush.msra.mxu0 0.0
  %439 = vmatpush.msra.mxu0 0.0
  %440 = vmatpush.msra.mxu0 0.0
  %441 = vmatpush.msra.mxu0 %v285
  %442 = vmatpush.msra.mxu0 %v283
  %443 = vmatpush.msra.mxu0 %v281
  %444 = vmatpush.msra.mxu0 %v279
  %445 = vmatmul.f32.gmra.mxu0 %v288
  %v446 = vpop.f32.mrf.mxu0
  %v447 = vadd.f32 %v394, %v446
  %448 = vmatmul.f32.gmra.mxu0 %v291
  %v449 = vpop.f32.mrf.mxu0
  %v450 = vadd.f32 %v397, %v449
  %451 = vmatmul.f32.gmra.mxu0 %v294
  %v452 = vpop.f32.mrf.mxu0
  %v453 = vadd.f32 %v400, %v452
  %454 = vmatmul.f32.gmra.mxu0 %v297
  %v455 = vpop.f32.mrf.mxu0
  %v456 = vadd.f32 %v403, %v455
  %457 = vmatmul.f32.gmra.mxu0 %v300
  %v458 = vpop.f32.mrf.mxu0
  %v459 = vadd.f32 %v406, %v458
  %460 = vmatmul.f32.gmra.mxu0 %v303
  %v461 = vpop.f32.mrf.mxu0
  %v462 = vadd.f32 %v409, %v461
  %463 = vmatmul.f32.gmra.mxu0 %v306
  %v464 = vpop.f32.mrf.mxu0
  %v465 = vadd.f32 %v412, %v464
  %466 = vmatmul.f32.gmra.mxu0 %v309
  %v467 = vpop.f32.mrf.mxu0
  %v468 = vadd.f32 %v415, %v467
  %469 = vmatmul.f32.gmra.mxu0 %v312
  %v470 = vpop.f32.mrf.mxu0
  %v471 = vadd.f32 %v418, %v470
  %472 = vmatmul.f32.gmra.mxu0 %v315
  %v473 = vpop.f32.mrf.mxu0
  %v474 = vadd.f32 %v421, %v473
  %475 = vmatmul.f32.gmra.mxu0 %v318
  %v476 = vpop.f32.mrf.mxu0
  %v477 = vadd.f32 %v424, %v476
  %478 = vmatmul.f32.gmra.mxu0 %v321
  %v479 = vpop.f32.mrf.mxu0
  %v480 = vadd.f32 %v427, %v479
  %481 = vdwg.mxu0
  %482 = vmatpush.msra.mxu0 %v246
  %483 = vmatpush.msra.mxu0 %v244
  %484 = vmatpush.msra.mxu0 %v242
  %485 = vmatpush.msra.mxu0 %v240
  %486 = vmatpush.msra.mxu0 %v238
  %487 = vmatpush.msra.mxu0 %v236
  %488 = vmatpush.msra.mxu0 %v234
  %489 = vmatpush.msra.mxu0 %v232
  %490 = vmatpush.msra.mxu0 %v230
  %491 = vmatpush.msra.mxu0 %v228
  %492 = vmatpush.msra.mxu0 %v226
  %493 = vmatpush.msra.mxu0 %v224
  %494 = vmatpush.msra.mxu0 %v222
  %495 = vmatpush.msra.mxu0 %v220
  %496 = vmatpush.msra.mxu0 %v218
  %497 = vmatpush.msra.mxu0 %v216
  %498 = vmatmul.f32.gmra.mxu0 %v179
  %v499 = vpop.f32.mrf.mxu0
  %v500 = vadd.f32 0.0, %v499
  %501 = vmatmul.f32.gmra.mxu0 %v182
  %v502 = vpop.f32.mrf.mxu0
  %v503 = vadd.f32 0.0, %v502
  %504 = vmatmul.f32.gmra.mxu0 %v185
  %v505 = vpop.f32.mrf.mxu0
  %v506 = vadd.f32 0.0, %v505
  %507 = vmatmul.f32.gmra.mxu0 %v188
  %v508 = vpop.f32.mrf.mxu0
  %v509 = vadd.f32 0.0, %v508
  %510 = vmatmul.f32.gmra.mxu0 %v191
  %v511 = vpop.f32.mrf.mxu0
  %v512 = vadd.f32 0.0, %v511
  %513 = vmatmul.f32.gmra.mxu0 %v194
  %v514 = vpop.f32.mrf.mxu0
  %v515 = vadd.f32 0.0, %v514
  %516 = vmatmul.f32.gmra.mxu0 %v197
  %v517 = vpop.f32.mrf.mxu0
  %v518 = vadd.f32 0.0, %v517
  %519 = vmatmul.f32.gmra.mxu0 %v200
  %v520 = vpop.f32.mrf.mxu0
  %v521 = vadd.f32 0.0, %v520
  %522 = vmatmul.f32.gmra.mxu0 %v203
  %v523 = vpop.f32.mrf.mxu0
  %v524 = vadd.f32 0.0, %v523
  %525 = vmatmul.f32.gmra.mxu0 %v206
  %v526 = vpop.f32.mrf.mxu0
  %v527 = vadd.f32 0.0, %v526
  %528 = vmatmul.f32.gmra.mxu0 %v209
  %v529 = vpop.f32.mrf.mxu0
  %v530 = vadd.f32 0.0, %v529
  %531 = vmatmul.f32.gmra.mxu0 %v212
  %v532 = vpop.f32.mrf.mxu0
  %v533 = vadd.f32 0.0, %v532
  %534 = vdwg.mxu0
  %535 = vmatpush.msra.mxu0 %v278
  %536 = vmatpush.msra.mxu0 %v276
  %537 = vmatpush.msra.mxu0 %v274
  %538 = vmatpush.msra.mxu0 %v272
  %539 = vmatpush.msra.mxu0 %v270
  %540 = vmatpush.msra.mxu0 %v268
  %541 = vmatpush.msra.mxu0 %v266
  %542 = vmatpush.msra.mxu0 %v264
  %543 = vmatpush.msra.mxu0 %v262
  %544 = vmatpush.msra.mxu0 %v260
  %545 = vmatpush.msra.mxu0 %v258
  %546 = vmatpush.msra.mxu0 %v256
  %547 = vmatpush.msra.mxu0 %v254
  %548 = vmatpush.msra.mxu0 %v252
  %549 = vmatpush.msra.mxu0 %v250
  %550 = vmatpush.msra.mxu0 %v248
  %551 = vmatmul.f32.gmra.mxu0 %v180
  %v552 = vpop.f32.mrf.mxu0
  %v553 = vadd.f32 %v500, %v552
  %554 = vmatmul.f32.gmra.mxu0 %v183
  %v555 = vpop.f32.mrf.mxu0
  %v556 = vadd.f32 %v503, %v555
  %557 = vmatmul.f32.gmra.mxu0 %v186
  %v558 = vpop.f32.mrf.mxu0
  %v559 = vadd.f32 %v506, %v558
  %560 = vmatmul.f32.gmra.mxu0 %v189
  %v561 = vpop.f32.mrf.mxu0
  %v562 = vadd.f32 %v509, %v561
  %563 = vmatmul.f32.gmra.mxu0 %v192
  %v564 = vpop.f32.mrf.mxu0
  %v565 = vadd.f32 %v512, %v564
  %566 = vmatmul.f32.gmra.mxu0 %v195
  %v567 = vpop.f32.mrf.mxu0
  %v568 = vadd.f32 %v515, %v567
  %569 = vmatmul.f32.gmra.mxu0 %v198
  %v570 = vpop.f32.mrf.mxu0
  %v571 = vadd.f32 %v518, %v570
  %572 = vmatmul.f32.gmra.mxu0 %v201
  %v573 = vpop.f32.mrf.mxu0
  %v574 = vadd.f32 %v521, %v573
  %575 = vmatmul.f32.gmra.mxu0 %v204
  %v576 = vpop.f32.mrf.mxu0
  %v577 = vadd.f32 %v524, %v576
  %578 = vmatmul.f32.gmra.mxu0 %v207
  %v579 = vpop.f32.mrf.mxu0
  %v580 = vadd.f32 %v527, %v579
  %581 = vmatmul.f32.gmra.mxu0 %v210
  %v582 = vpop.f32.mrf.mxu0
  %v583 = vadd.f32 %v530, %v582
  %584 = vmatmul.f32.gmra.mxu0 %v213
  %v585 = vpop.f32.mrf.mxu0
  %v586 = vadd.f32 %v533, %v585
  %587 = vdwg.mxu0
  %588 = vmatpush.msra.mxu0 0.0
  %589 = vmatpush.msra.mxu0 0.0
  %590 = vmatpush.msra.mxu0 0.0
  %591 = vmatpush.msra.mxu0 0.0
  %592 = vmatpush.msra.mxu0 0.0
  %593 = vmatpush.msra.mxu0 0.0
  %594 = vmatpush.msra.mxu0 0.0
  %595 = vmatpush.msra.mxu0 0.0
  %596 = vmatpush.msra.mxu0 0.0
  %597 = vmatpush.msra.mxu0 0.0
  %598 = vmatpush.msra.mxu0 0.0
  %599 = vmatpush.msra.mxu0 0.0
  %600 = vmatpush.msra.mxu0 %v286
  %601 = vmatpush.msra.mxu0 %v284
  %602 = vmatpush.msra.mxu0 %v282
  %603 = vmatpush.msra.mxu0 %v280
  %604 = vmatmul.f32.gmra.mxu0 %v288
  %v605 = vpop.f32.mrf.mxu0
  %v606 = vadd.f32 %v553, %v605
  %607 = vmatmul.f32.gmra.mxu0 %v291
  %v608 = vpop.f32.mrf.mxu0
  %v609 = vadd.f32 %v556, %v608
  %610 = vmatmul.f32.gmra.mxu0 %v294
  %v611 = vpop.f32.mrf.mxu0
  %v612 = vadd.f32 %v559, %v611
  %613 = vmatmul.f32.gmra.mxu0 %v297
  %v614 = vpop.f32.mrf.mxu0
  %v615 = vadd.f32 %v562, %v614
  %616 = vmatmul.f32.gmra.mxu0 %v300
  %v617 = vpop.f32.mrf.mxu0
  %v618 = vadd.f32 %v565, %v617
  %619 = vmatmul.f32.gmra.mxu0 %v303
  %v620 = vpop.f32.mrf.mxu0
  %v621 = vadd.f32 %v568, %v620
  %622 = vmatmul.f32.gmra.mxu0 %v306
  %v623 = vpop.f32.mrf.mxu0
  %v624 = vadd.f32 %v571, %v623
  %625 = vmatmul.f32.gmra.mxu0 %v309
  %v626 = vpop.f32.mrf.mxu0
  %v627 = vadd.f32 %v574, %v626
  %628 = vmatmul.f32.gmra.mxu0 %v312
  %v629 = vpop.f32.mrf.mxu0
  %v630 = vadd.f32 %v577, %v629
  %631 = vmatmul.f32.gmra.mxu0 %v315
  %v632 = vpop.f32.mrf.mxu0
  %v633 = vadd.f32 %v580, %v632
  %634 = vmatmul.f32.gmra.mxu0 %v318
  %v635 = vpop.f32.mrf.mxu0
  %v636 = vadd.f32 %v583, %v635
  %637 = vmatmul.f32.gmra.mxu0 %v321
  %v638 = vpop.f32.mrf.mxu0
  %v639 = vadd.f32 %v586, %v638
  %640 = vdwg.mxu0
  %641 = vst [vmem:[%s5] sm:$0xff] %v447
  %vm642 = vcmask 556032
  %643 = vst.msk [vmem:[%s5 + $0x8] sm:$0xff] %vm642, %v606
  %644 = vst [vmem:[%s5 + $0x10] sm:$0xff] %v450
  %645 = vst.msk [vmem:[%s5 + $0x18] sm:$0xff] %vm642, %v609
  %646 = vst [vmem:[%s5 + $0x20] sm:$0xff] %v453
  %647 = vst.msk [vmem:[%s5 + $0x28] sm:$0xff] %vm642, %v612
  %648 = vst [vmem:[%s5 + $0x30] sm:$0xff] %v456
  %649 = vst.msk [vmem:[%s5 + $0x38] sm:$0xff] %vm642, %v615
  %650 = vst [vmem:[%s5 + $0x40] sm:$0xff] %v459
  %651 = vst.msk [vmem:[%s5 + $0x48] sm:$0xff] %vm642, %v618
  %652 = vst [vmem:[%s5 + $0x50] sm:$0xff] %v462
  %653 = vst.msk [vmem:[%s5 + $0x58] sm:$0xff] %vm642, %v621
  %654 = vst [vmem:[%s5 + $0x60] sm:$0xff] %v465
  %655 = vst.msk [vmem:[%s5 + $0x68] sm:$0xff] %vm642, %v624
  %656 = vst [vmem:[%s5 + $0x70] sm:$0xff] %v468
  %657 = vst.msk [vmem:[%s5 + $0x78] sm:$0xff] %vm642, %v627
  %658 = vst [vmem:[%s5 + $0x80] sm:$0xff] %v471
  %659 = vst.msk [vmem:[%s5 + $0x88] sm:$0xff] %vm642, %v630
  %660 = vst [vmem:[%s5 + $0x90] sm:$0xff] %v474
  %661 = vst.msk [vmem:[%s5 + $0x98] sm:$0xff] %vm642, %v633
  %662 = vst [vmem:[%s5 + $0xa0] sm:$0xff] %v477
  %663 = vst.msk [vmem:[%s5 + $0xa8] sm:$0xff] %vm642, %v636
  %664 = vst [vmem:[%s5 + $0xb0] sm:$0xff] %v480
  %665 = vst.msk [vmem:[%s5 + $0xb8] sm:$0xff] %vm642, %v639
  // Predicated region
  $region22: #{se_conv.1} parent=0 // pred_check
    _
  $region23: #{se_conv.1} parent=0 // pred_check_branch
    %667 = sbr.rel (0) target = $region25
  $region24: #{se_conv.1} parent=0 // pred_region
    _
  $region25: #{se_conv.1} parent=0 // pred_fallthru
    _
  // Predicated region
  $region26: #{se_conv.1} parent=0 // pred_check
    _
  $region27: #{se_conv.1} parent=0 // pred_check_branch
    %669 = sbr.rel (0) target = $region29
  $region28: #{se_conv.1} parent=0 // pred_region
    _
  $region29: #{se_conv.1} parent=0 // pred_fallthru
    _

</llo_original>
